<compile_context>
chip_gen: v6e
topology: v6e:2x2x1
jax: 0.10.0
libtpu: 0.0.40
codegen_flags: <defaults>
</compile_context>

<pallas_src>
import functools

import jax
import jax.numpy as jnp
from jax.experimental import pallas as pl
from jax.experimental.pallas import tpu as pltpu

ETA = 0.1  # stand-in for args.eta (argparse global in the reference script)


def _duffing_interleaved_kernel(x_ref, o_ref, *, eta):
    # x_ref / o_ref: (TR, 128) f32 tiles of the flattened interleaved array
    # [q0, p0, q1, p1, ...]; even lanes hold q, odd lanes hold p.
    x = x_ref[...]

    # Align neighbors within each (q, p) pair (pairs never straddle a row, so
    # the wrap-around lanes of each roll are never selected below).
    p_even = pltpu.roll(x, shift=127, axis=1)   # out[i] = x[i+1]: p onto even lanes
    q_odd = pltpu.roll(x, shift=1, axis=1)      # out[i] = x[i-1]: q onto odd lanes

    lane = jax.lax.broadcasted_iota(jnp.int32, x.shape, dimension=1)
    is_even = (lane & 1) == 0

    # field = [p, -(q^3 - q) - eta*p]; on odd lanes x itself holds p.
    f_odd = -(q_odd * q_odd * q_odd - q_odd) - eta * x
    o_ref[...] = jnp.where(is_even, p_even, f_odd)


def permutation_tensor(n):
    M = jnp.eye(n, dtype=jnp.float32)
    return jnp.concatenate([M[n // 2:], -M[: n // 2]], axis=0)


def ode_duffing_forward(t, x, eta=ETA, max_row_tile=1024):
    """Pallas-backed equivalent of ODE_duffing.forward(t, x). `t` is unused."""
    del t
    B, D = x.shape
    assert D == 2, "ODE_duffing is defined for input_dim == 2 (q, p)"

    x = x.astype(jnp.float32)
    flat = x.reshape(-1)                       # row-major: [q0, p0, q1, p1, ...]
    n = flat.shape[0]

    # Tile the flattened array into (rows, 128) lane-dense rows; row tile is a
    # multiple of 8 sublanes, capped at max_row_tile (512 KiB f32 per tile).
    rows = pl.cdiv(n, 128)
    tr = min(max_row_tile, pl.next_power_of_2(max(rows, 8)))
    tr = max(8, (tr // 8) * 8)
    rows_p = pl.cdiv(rows, tr) * tr
    n_pad = rows_p * 128
    if n_pad != n:
        flat = jnp.pad(flat, (0, n_pad - n))
    xm = flat.reshape(rows_p, 128)

    kernel = functools.partial(_duffing_interleaved_kernel, eta=eta)
    out = pl.pallas_call(
        kernel,
        out_shape=jax.ShapeDtypeStruct((rows_p, 128), jnp.float32),
        grid=(rows_p // tr,),
        in_specs=[pl.BlockSpec((tr, 128), lambda i: (i, 0))],
        out_specs=pl.BlockSpec((tr, 128), lambda i: (i, 0)),
        compiler_params=pltpu.CompilerParams(
            dimension_semantics=("parallel",)),
    )(xm)

    # Back to the module's (B, 2) layout (free reshape + tail slice).
    return out.reshape(-1)[:n].reshape(B, D)


def _reference(x, M, eta=ETA):
    q, p = x[:, 0:1], x[:, 1:2]
    dH = jnp.concatenate([q ** 3 - q, p], axis=1)
    field = dH @ M.T
    dH = dH.at[:, 0].set(0.0)
    return field - eta * dH


if __name__ == "__main__":
    key = jax.random.PRNGKey(0)
    input_dim = 2
    t = jnp.zeros((), dtype=jnp.float32)
    M = permutation_tensor(input_dim)

    # Small test shape matching the module (batch of phase-space points).
    B = 8
    x = jax.random.normal(key, (B, input_dim), dtype=jnp.float32)
    out = jax.block_until_ready(ode_duffing_forward(t, x))
    ref = _reference(x, M)
    assert out.shape == (B, input_dim)
    assert jnp.allclose(out, ref, atol=1e-5, rtol=1e-5)

    # Second check: ragged batch that exercises padding + the full-row path.
    B2 = 300
    x2 = jax.random.normal(jax.random.PRNGKey(1), (B2, input_dim),
                           dtype=jnp.float32)
    out2 = jax.block_until_ready(ode_duffing_forward(t, x2))
    ref2 = _reference(x2, M)
    assert out2.shape == (B2, input_dim)
    assert jnp.allclose(out2, ref2, atol=1e-5, rtol=1e-5)

    # Third check: multi-tile grid (rows_p // tr > 1 path).
    B3 = 70000
    x3 = jax.random.normal(jax.random.PRNGKey(2), (B3, input_dim),
                           dtype=jnp.float32)
    out3 = jax.block_until_ready(ode_duffing_forward(t, x3, max_row_tile=512))
    ref3 = _reference(x3, M)
    assert out3.shape == (B3, input_dim)
    assert jnp.allclose(out3, ref3, atol=1e-5, rtol=1e-5)

    print("KERNEL_OK")
</pallas_src>

<mosaic_0001>
module attributes {stable_mosaic.version = 11 : i64} {
  func.func @_duffing_interleaved_kernel(%arg0: i32, %arg1: memref<8x128xf32, #tpu.memory_space<vmem>>, %arg2: memref<8x128xf32, #tpu.memory_space<vmem>>) attributes {dimension_semantics = [#tpu.dimension_semantics<parallel>], iteration_bounds = array<i64: 1>, scalar_prefetch = 0 : i64, scratch_operands = 0 : i64, tpu.core_type = #tpu.core_type<tc>, window_params = [{transform_indices = @transform_0, window_bounds = array<i64: 8, 128>}, {transform_indices = @transform_1, window_bounds = array<i64: 8, 128>}]} {
    %c0 = arith.constant 0 : index
    %c0_0 = arith.constant 0 : index
    %0 = vector.load %arg1[%c0, %c0_0] : memref<8x128xf32, #tpu.memory_space<vmem>>, vector<8x128xf32>
    %c127_i32 = arith.constant 127 : i32
    %1 = tpu.dynamic_rotate %0 by %c127_i32 dim 1 : vector<8x128xf32>, i32 -> vector<8x128xf32>
    %c1_i32 = arith.constant 1 : i32
    %2 = tpu.dynamic_rotate %0 by %c1_i32 dim 1 : vector<8x128xf32>, i32 -> vector<8x128xf32>
    %3 = tpu.iota {dimensions = array<i32: 1>} : vector<8x128xi32>
    %c1_i32_1 = arith.constant 1 : i32
    %4 = vector.broadcast %c1_i32_1 : i32 to vector<8x128xi32>
    %5 = arith.andi %3, %4 : vector<8x128xi32>
    %c0_i32 = arith.constant 0 : i32
    %6 = vector.broadcast %c0_i32 : i32 to vector<8x128xi32>
    %7 = arith.cmpi eq, %5, %6 : vector<8x128xi32>
    %8 = arith.mulf %2, %2 : vector<8x128xf32>
    %9 = arith.mulf %8, %2 : vector<8x128xf32>
    %10 = arith.subf %9, %2 : vector<8x128xf32>
    %cst = arith.constant 0.000000e+00 : f32
    %11 = vector.broadcast %cst : f32 to vector<8x128xf32>
    %12 = arith.subf %11, %10 : vector<8x128xf32>
    %cst_2 = arith.constant 1.000000e-01 : f32
    %13 = vector.broadcast %cst_2 : f32 to vector<8x128xf32>
    %14 = arith.mulf %13, %0 : vector<8x128xf32>
    %15 = arith.subf %12, %14 : vector<8x128xf32>
    %16 = arith.select %7, %1, %15 : vector<8x128xi1>, vector<8x128xf32>
    %c0_3 = arith.constant 0 : index
    %c0_4 = arith.constant 0 : index
    %17 = vector.load %arg2[%c0_3, %c0_4] : memref<8x128xf32, #tpu.memory_space<vmem>>, vector<8x128xf32>
    tpu.vector_store %arg2[%c0_3, %c0_4], %16 {strides = array<i32>} : memref<8x128xf32, #tpu.memory_space<vmem>>, vector<8x128xf32>,
    return
  }
  func.func @transform_0(%arg0: i32) -> (i32, i32) {
    %c0_i32 = arith.constant 0 : i32
    %c0_i32_0 = arith.constant 0 : i32
    return %arg0, %c0_i32 : i32, i32
  }
  func.func @transform_1(%arg0: i32) -> (i32, i32) {
    %c0_i32 = arith.constant 0 : i32
    %c0_i32_0 = arith.constant 0 : i32
    return %arg0, %c0_i32 : i32, i32
  }
}

</mosaic_0001>

<llo_original>
// kernel: tpu_custom_call.1
$region0: #{tpu_custom_call.1}
  #allocation0 [shape = 'u32[]', space=smem, size = 0x4, offset = 0x4, fixed_abs, tag = 'smem constant byte address 0x4 - core index']
  #allocation1 [shape = 'u32[144,128]{1,0:T(1,128)}', space=vmem, size = 0x12000, scoped, tag = 'internal scratch']
  %s0 = inlined_call_operand.hbm [shape: f32[8,128], index: 0, kind: input, shape index: {}]
  %s1 = inlined_call_operand.hbm [shape: f32[8,128], index: 1, kind: output, shape index: {}]
  %s2 = sld [smem:[#allocation0]]
  $region18: #{tpu_custom_call.1} parent=0
    _
  %s4 = ssub.s32 1, %s2
  %s5 = scalar_select 0, %s4, %s2
  $region1: #{tpu_custom_call.1} parent=0
    #allocation2 [shape = 'u8[4096]{0}', space=vmem, size = 0x1000, scoped, tag = 'input window, operand 0, single buffered']
    #allocation3 [shape = 's32[1]{0}', space=sflag, size = 0x4, scoped, tag = 'scoped memory for tpu_custom_call.1']
    #allocation4 [shape = 's32[1]{0}', space=sflag, size = 0x4, scoped, tag = 'scoped memory for tpu_custom_call.1']
    #allocation5 [shape = 'u8[4096]{0}', space=vmem, size = 0x1000, scoped, tag = 'output window, operand 0, single buffered']
    %6 = vsyncpa [#allocation3], 0
    %7 = vsyncpa [#allocation4], 0
    // Predicated region
    $region2: #{tpu_custom_call.1} parent=1 // pred_check
      _
    $region3: #{tpu_custom_call.1} parent=1 // pred_check_branch
      %9 = sbr.rel (0) target = $region5
    $region4: #{tpu_custom_call.1} parent=1 // pred_region
      %s11 = ssub.s32 128, 128
      %12 = vsyncadd [#allocation3], %s11
      %s14 = sshll.u32 [#allocation2], 4
      %s15 = int_to_ptr.vmem [resolvable:$true] %s14
      %17 = dma.hbm_to_vmem [thread:$0]  %s0, 128, %s15, [#allocation3]
    $region5: #{tpu_custom_call.1} parent=1 // pred_fallthru
      _
    // Predicated region
    $region6: #{tpu_custom_call.1} parent=1 // pred_check
      _
    $region7: #{tpu_custom_call.1} parent=1 // pred_check_branch
      %19 = sbr.rel (0) target = $region9
    $region8: #{tpu_custom_call.1} parent=1 // pred_region
      %20 = dma.done [#allocation3], 128
    $region9: #{tpu_custom_call.1} parent=1 // pred_fallthru
      _
    %v21 = vld [vmem:[#allocation2] sm:$0xff]
    %22 = vrot.lane.b32.xlu0 %v21, 127
    %v23 = vpop.permute.xlu0 %22
    %24 = vrot.lane.b32.xlu0 %v21, 1
    %v25 = vpop.permute.xlu0 %24
    %v26 = vlaneseq
    %v27 = vand.u32 %v26, 127
    %v28 = vand.u32 %v27, 1
    %vm29 = vcmp.eq.s32.totalorder %v28, 0
    %v30 = vmul.f32 %v25, %v25
    %v31 = vmul.f32 %v30, %v25
    %v32 = vsub.f32 %v31, %v25
    %v33 = vsub.f32 0.0, %v32
    %v34 = vmul.f32 %v21, 0.1
    %v35 = vsub.f32 %v33, %v34
    %v36 = vsel %vm29, %v23, %v35
    %37 = vst [vmem:[#allocation5] sm:$0xff] %v36
    // Predicated region
    $region10: #{tpu_custom_call.1} parent=1 // pred_check
      _
    $region11: #{tpu_custom_call.1} parent=1 // pred_check_branch
      %39 = sbr.rel (0) target = $region13
    $region12: #{tpu_custom_call.1} parent=1 // pred_region
      %s41 = ssub.s32 128, 128
      %42 = vsyncadd [#allocation4], %s41
      %s44 = sshll.u32 [#allocation5], 4
      %s45 = int_to_ptr.vmem [resolvable:$true] %s44
      %47 = dma.vmem_to_hbm [thread:$0]  %s45, 128, %s1, [#allocation4]
    $region13: #{tpu_custom_call.1} parent=1 // pred_fallthru
      _
    // Predicated region
    $region14: #{tpu_custom_call.1} parent=1 // pred_check
      _
    $region15: #{tpu_custom_call.1} parent=1 // pred_check_branch
      %49 = sbr.rel (0) target = $region17
    $region16: #{tpu_custom_call.1} parent=1 // pred_region
      %50 = dma.done [#allocation4], 128
    $region17: #{tpu_custom_call.1} parent=1 // pred_fallthru
      _
    %51 = vsyncpa [#allocation3], 1
    %52 = vsyncpa [#allocation4], 1

</llo_original>
